<compile_context>
chip_gen: v6e
topology: v6e:2x2x1
jax: 0.10.0
libtpu: 0.0.40
codegen_flags: <defaults>
</compile_context>

<pallas_src>
import functools

import jax
import jax.numpy as jnp
from jax.experimental import pallas as pl
from jax.experimental.pallas import tpu as pltpu

EPS = 1e-5                 # PyTorch InstanceNorm2d default
_VMEM_BUDGET = 40 << 20    # per-step block budget (leaves headroom on v7x 64 MiB)


def _round_up(x, m):
    return ((x + m - 1) // m) * m


def _down_block_kernel(w_ref, p_ref, o_ref, conv_buf, s_ref, ss_ref,
                       *, inv_hw, hw_tile, n_hw):
    # w_ref    : (cout_tile, K_pad)          im2col weight tile   (VMEM, bf16/f32)
    # p_ref    : (1, K_pad, hw_tile)         im2col patch tile    (VMEM, bf16/f32)
    # o_ref    : (1, cout_tile, HW_pad)      f32 output slab, resident across HW axis
    # conv_buf : (n_hw, cout_tile, hw_tile)  f32 staging scratch for raw conv tiles
    # s_ref/ss_ref : (cout_tile, 1)          f32 sum / sum-of-squares accumulators
    hw = pl.program_id(2)

    @pl.when(hw == 0)
    def _init():
        s_ref[...] = jnp.zeros_like(s_ref)
        ss_ref[...] = jnp.zeros_like(ss_ref)

    # One MXU matmul per (image, Cout tile, HW tile); f32 accumulation.
    conv = jnp.dot(w_ref[...], p_ref[0], preferred_element_type=jnp.float32)

    # One-pass statistics (sum & sum-of-squares; the two XLU reductions overlap).
    s_ref[...] += jnp.sum(conv, axis=-1, keepdims=True)
    ss_ref[...] += jnp.sum(conv * conv, axis=-1, keepdims=True)

    # Stage the raw conv tile (dynamic index on the untiled leading dim only).
    conv_buf[hw] = conv

    @pl.when(hw == n_hw - 1)
    def _finalize():
        # InstanceNorm2d (no affine, biased variance) + ReLU over the true HW.
        mean = s_ref[...] * inv_hw
        var = ss_ref[...] * inv_hw - mean * mean
        inv_std = jax.lax.rsqrt(jnp.maximum(var, 0.0) + EPS)
        for i in range(n_hw):   # static unroll -> lane-aligned full-width stores
            o_ref[0, :, i * hw_tile:(i + 1) * hw_tile] = jnp.maximum(
                (conv_buf[i] - mean) * inv_std, 0.0)


def down_block(x, w, b=None, *, cout_tile=None, hw_tile_max=2048,
               compute_dtype=jnp.bfloat16):
    """DownBlock forward. x: (N, Cin, H, W) f32; w: (Cout, Cin, 3, 3); b: (Cout,)."""
    N, C, H, W = x.shape
    C_out = w.shape[0]
    H_out = (H + 2 - 3) // 2 + 1        # Conv2d(k=3, stride=2, pad=1, dil=1)
    W_out = (W + 2 - 3) // 2 + 1
    HW = H_out * W_out

    # Conv bias is a per-channel constant added before an affine-free
    # InstanceNorm -> exactly removed by the mean subtraction; accepted for API
    # parity but never enters the kernel.
    del b

    # ---- im2col (XLA): 9 strided taps of the padded input -> (N, 9*Cin, HW).
    xp = jnp.pad(x, ((0, 0), (0, 0), (1, 1), (1, 1)))
    taps = [xp[:, :, ky:ky + 2 * H_out:2, kx:kx + 2 * W_out:2]
            for ky in range(3) for kx in range(3)]
    patches = jnp.stack(taps, axis=1).reshape(N, 9 * C, HW)
    w2d = jnp.transpose(w, (0, 2, 3, 1)).reshape(C_out, 9 * C)
    # TODO(synk): for very large H*W with small Cin the wrapper-side im2col costs
    # an extra HBM round trip; fusing the 9-tap gather into the kernel would save it.

    # ---- lane / K alignment padding.
    K = 9 * C
    K_pad = _round_up(K, 128)
    hw_tile_max = max(128, (hw_tile_max // 128) * 128)
    if HW <= hw_tile_max:
        hw_tile = _round_up(HW, 128)
        HW_pad = hw_tile
    else:
        hw_tile = hw_tile_max
        HW_pad = _round_up(HW, hw_tile)
    n_hw = HW_pad // hw_tile

    patches = jnp.pad(patches, ((0, 0), (0, K_pad - K), (0, HW_pad - HW)))
    patches = patches.astype(compute_dtype)
    w2d = jnp.pad(w2d, ((0, 0), (0, K_pad - K))).astype(compute_dtype)

    itemsize = jnp.dtype(compute_dtype).itemsize

    def _block_bytes(ct):
        return (2 * ct * K_pad * itemsize          # double-buffered weight tile
                + 2 * K_pad * hw_tile * itemsize   # double-buffered patch tile
                + 2 * ct * HW_pad * 4              # double-buffered f32 out block
                + ct * HW_pad * 4                  # conv staging scratch
                + 2 * ct * 128 * 4)                # sum/sumsq scratch (lane-padded)

    # ---- Cout tiling: multiple of 8 (f32 sublane), target the 256-wide MXU M
    # dim, stay within the VMEM byte budget, keep >=2 parallel grid steps for
    # the two v7x TensorCores when N == 1.
    divs = sorted({t for t in range(8, C_out + 1, 8) if C_out % t == 0},
                  reverse=True)
    if cout_tile is None:
        cands = [t for t in divs if t <= 256] or ([min(divs)] if divs else [])
        chosen = None
        for t in cands:
            if _block_bytes(t) <= _VMEM_BUDGET:
                chosen = t
                break
        if chosen is None:
            chosen = cands[-1] if cands else C_out
        cout_tile = chosen
        if N == 1 and C_out // cout_tile == 1:
            halves = [t for t in divs if t <= C_out // 2]
            if halves:
                cout_tile = halves[0]
    else:
        cout_tile = int(cout_tile)
        if cout_tile >= C_out:
            cout_tile = C_out
        else:
            cout_tile = max(8, (cout_tile // 8) * 8)     # f32 sublane multiple
            if C_out % cout_tile != 0:
                ok = [t for t in divs if t <= cout_tile]
                cout_tile = max(ok) if ok else C_out
    n_co = C_out // cout_tile

    vmem_limit = int(min(max(int(_block_bytes(cout_tile) * 1.5) + (4 << 20),
                             32 << 20), 128 << 20))

    kernel = functools.partial(_down_block_kernel,
                               inv_hw=1.0 / HW, hw_tile=hw_tile, n_hw=n_hw)

    out = pl.pallas_call(
        kernel,
        out_shape=jax.ShapeDtypeStruct((N, C_out, HW_pad), jnp.float32),
        grid_spec=pltpu.PrefetchScalarGridSpec(
            num_scalar_prefetch=0,
            grid=(N, n_co, n_hw),
            in_specs=[
                pl.BlockSpec((cout_tile, K_pad), lambda n, co, hw: (co, 0)),
                pl.BlockSpec((1, K_pad, hw_tile), lambda n, co, hw: (n, 0, hw)),
            ],
            out_specs=pl.BlockSpec((1, cout_tile, HW_pad),
                                   lambda n, co, hw: (n, co, 0)),
            scratch_shapes=[
                pltpu.VMEM((n_hw, cout_tile, hw_tile), jnp.float32),
                pltpu.VMEM((cout_tile, 1), jnp.float32),
                pltpu.VMEM((cout_tile, 1), jnp.float32),
            ]),
        compiler_params=pltpu.CompilerParams(
            dimension_semantics=("parallel", "parallel", "arbitrary"),
            vmem_limit_bytes=vmem_limit),
    )(w2d, patches)

    return out[:, :, :HW].reshape(N, C_out, H_out, W_out)


# ---------------- pure-JAX reference (for correctness check) ----------------
def reference(x, w, b):
    out = jax.lax.conv_general_dilated(
        x, w, window_strides=(2, 2), padding=((1, 1), (1, 1)),
        dimension_numbers=("NCHW", "OIHW", "NCHW"))
    out = out + b[None, :, None, None]
    mean = jnp.mean(out, axis=(2, 3), keepdims=True)
    var = jnp.mean((out - mean) ** 2, axis=(2, 3), keepdims=True)
    return jnp.maximum((out - mean) / jnp.sqrt(var + EPS), 0.0)


if __name__ == "__main__":
    # Case 1: module-sized toy config (batch=2, ins=4, outs=8, spatial=16).
    kx, kw, kb = jax.random.split(jax.random.PRNGKey(0), 3)
    N, C_in, C_out, H, W = 2, 4, 8, 16, 16
    x = jax.random.normal(kx, (N, C_in, H, W), dtype=jnp.float32)
    w = jax.random.normal(kw, (C_out, C_in, 3, 3), dtype=jnp.float32) * 0.1
    b = jax.random.normal(kb, (C_out,), dtype=jnp.float32) * 0.1
    ref = reference(x, w, b)

    out_f32 = down_block(x, w, b, compute_dtype=jnp.float32)
    jax.block_until_ready(out_f32)
    assert out_f32.shape == (N, C_out, H // 2, W // 2), out_f32.shape
    err32 = float(jnp.max(jnp.abs(out_f32 - ref)))
    assert jnp.allclose(out_f32, ref, atol=1e-4, rtol=1e-4), err32

    out_bf16 = down_block(x, w, b)   # default: bf16 MXU inputs, f32 accumulation
    jax.block_until_ready(out_bf16)
    errbf = float(jnp.max(jnp.abs(out_bf16 - ref)))
    assert jnp.allclose(out_bf16, ref, atol=5e-2, rtol=5e-2), errbf

    # Case 2: odd spatial size, multiple HW tiles, N=1 (exercises the HW
    # accumulator path, lane padding, and the Cout split for two TensorCores).
    kx2, kw2, kb2 = jax.random.split(jax.random.PRNGKey(1), 3)
    N2, C_in2, C_out2, H2, W2 = 1, 3, 16, 33, 33
    x2 = jax.random.normal(kx2, (N2, C_in2, H2, W2), dtype=jnp.float32)
    w2 = jax.random.normal(kw2, (C_out2, C_in2, 3, 3), dtype=jnp.float32) * 0.1
    b2 = jax.random.normal(kb2, (C_out2,), dtype=jnp.float32) * 0.1
    ref2 = reference(x2, w2, b2)

    out2 = down_block(x2, w2, b2, hw_tile_max=128, compute_dtype=jnp.float32)
    jax.block_until_ready(out2)
    assert out2.shape == ref2.shape, (out2.shape, ref2.shape)
    err2 = float(jnp.max(jnp.abs(out2 - ref2)))
    assert jnp.allclose(out2, ref2, atol=1e-4, rtol=1e-4), err2

    print("KERNEL_OK")
</pallas_src>

<mosaic_0001>
module attributes {stable_mosaic.version = 11 : i64} {
  func.func @_down_block_kernel(%arg0: i32, %arg1: i32, %arg2: i32, %arg3: memref<8x128xf32, #tpu.memory_space<vmem>>, %arg4: memref<1x128x128xf32, #tpu.memory_space<vmem>>, %arg5: memref<1x8x128xf32, #tpu.memory_space<vmem>>, %arg6: memref<1x8x128xf32, #tpu.memory_space<vmem>>, %arg7: memref<8x1xf32, #tpu.memory_space<vmem>>, %arg8: memref<8x1xf32, #tpu.memory_space<vmem>>) attributes {dimension_semantics = [#tpu.dimension_semantics<parallel>, #tpu.dimension_semantics<parallel>, #tpu.dimension_semantics<arbitrary>], iteration_bounds = array<i64: 2, 1, 1>, scalar_prefetch = 0 : i64, scratch_operands = 3 : i64, tpu.core_type = #tpu.core_type<tc>, window_params = [{transform_indices = @transform_0, window_bounds = array<i64: 8, 128>}, {transform_indices = @transform_1, window_bounds = array<i64: 1, 128, 128>}, {transform_indices = @transform_2, window_bounds = array<i64: 1, 8, 128>}]} {
    %c0_i32 = arith.constant 0 : i32
    %0 = arith.cmpi eq, %arg2, %c0_i32 : i32
    %1 = arith.extui %0 : i1 to i32
    %c0_i32_0 = arith.constant 0 : i32
    %2 = arith.cmpi ne, %1, %c0_i32_0 : i32
    scf.if %2 {
      %cst_19 = arith.constant 0.000000e+00 : f32
      %25 = vector.broadcast %cst_19 : f32 to vector<8x1xf32>
      %c0_20 = arith.constant 0 : index
      %c0_21 = arith.constant 0 : index
      %26 = vector.load %arg7[%c0_20, %c0_21] : memref<8x1xf32, #tpu.memory_space<vmem>>, vector<8x1xf32>
      tpu.vector_store %arg7[%c0_20, %c0_21], %25 {strides = array<i32>} : memref<8x1xf32, #tpu.memory_space<vmem>>, vector<8x1xf32>,
      %cst_22 = arith.constant 0.000000e+00 : f32
      %27 = vector.broadcast %cst_22 : f32 to vector<8x1xf32>
      %c0_23 = arith.constant 0 : index
      %c0_24 = arith.constant 0 : index
      %28 = vector.load %arg8[%c0_23, %c0_24] : memref<8x1xf32, #tpu.memory_space<vmem>>, vector<8x1xf32>
      tpu.vector_store %arg8[%c0_23, %c0_24], %27 {strides = array<i32>} : memref<8x1xf32, #tpu.memory_space<vmem>>, vector<8x1xf32>,
    } else {
    }
    %c0 = arith.constant 0 : index
    %c0_1 = arith.constant 0 : index
    %3 = vector.load %arg3[%c0, %c0_1] : memref<8x128xf32, #tpu.memory_space<vmem>>, vector<8x128xf32>
    %c0_2 = arith.constant 0 : index
    %c0_3 = arith.constant 0 : index
    %c0_4 = arith.constant 0 : index
    %4 = vector.load %arg4[%c0_2, %c0_3, %c0_4] : memref<1x128x128xf32, #tpu.memory_space<vmem>>, vector<1x128x128xf32>
    %5 = vector.shape_cast %4 : vector<1x128x128xf32> to vector<128x128xf32>
    %cst = arith.constant dense<0.000000e+00> : vector<8x128xf32>
    %6 = tpu.matmul %3, %5, %cst {dimension_numbers = #tpu.dot_dimension_numbers<[1], [0], [0], [1], [0, 0, 1, 1], [], []>} : vector<8x128xf32>, vector<128x128xf32>, vector<8x128xf32> -> vector<8x128xf32>
    %c0_5 = arith.constant 0 : index
    %c0_6 = arith.constant 0 : index
    %7 = vector.load %arg7[%c0_5, %c0_6] : memref<8x1xf32, #tpu.memory_space<vmem>>, vector<8x1xf32>
    %cst_7 = arith.constant dense<0.000000e+00> : vector<8xf32>
    %8 = vector.multi_reduction <add>, %6, %cst_7 [1] : vector<8x128xf32> to vector<8xf32>
    %9 = vector.shape_cast %8 : vector<8xf32> to vector<8x1xf32>
    %10 = arith.addf %7, %9 : vector<8x1xf32>
    %c0_8 = arith.constant 0 : index
    %c0_9 = arith.constant 0 : index
    %11 = vector.load %arg7[%c0_8, %c0_9] : memref<8x1xf32, #tpu.memory_space<vmem>>, vector<8x1xf32>
    tpu.vector_store %arg7[%c0_8, %c0_9], %10 {strides = array<i32>} : memref<8x1xf32, #tpu.memory_space<vmem>>, vector<8x1xf32>,
    %c0_10 = arith.constant 0 : index
    %c0_11 = arith.constant 0 : index
    %12 = vector.load %arg8[%c0_10, %c0_11] : memref<8x1xf32, #tpu.memory_space<vmem>>, vector<8x1xf32>
    %13 = arith.mulf %6, %6 : vector<8x128xf32>
    %cst_12 = arith.constant dense<0.000000e+00> : vector<8xf32>
    %14 = vector.multi_reduction <add>, %13, %cst_12 [1] : vector<8x128xf32> to vector<8xf32>
    %15 = vector.shape_cast %14 : vector<8xf32> to vector<8x1xf32>
    %16 = arith.addf %12, %15 : vector<8x1xf32>
    %c0_13 = arith.constant 0 : index
    %c0_14 = arith.constant 0 : index
    %17 = vector.load %arg8[%c0_13, %c0_14] : memref<8x1xf32, #tpu.memory_space<vmem>>, vector<8x1xf32>
    tpu.vector_store %arg8[%c0_13, %c0_14], %16 {strides = array<i32>} : memref<8x1xf32, #tpu.memory_space<vmem>>, vector<8x1xf32>,
    %18 = arith.index_cast %arg2 : i32 to index
    %c0_15 = arith.constant 0 : index
    %c0_16 = arith.constant 0 : index
    %19 = vector.load %arg6[%18, %c0_15, %c0_16] : memref<1x8x128xf32, #tpu.memory_space<vmem>>, vector<1x8x128xf32>
    %20 = vector.shape_cast %19 : vector<1x8x128xf32> to vector<8x128xf32>
    %21 = vector.shape_cast %6 : vector<8x128xf32> to vector<1x8x128xf32>
    tpu.vector_store %arg6[%18, %c0_15, %c0_16], %21 {strides = array<i32>} : memref<1x8x128xf32, #tpu.memory_space<vmem>>, vector<1x8x128xf32>,
    %c0_i32_17 = arith.constant 0 : i32
    %22 = arith.cmpi eq, %arg2, %c0_i32_17 : i32
    %23 = arith.extui %22 : i1 to i32
    %c0_i32_18 = arith.constant 0 : i32
    %24 = arith.cmpi ne, %23, %c0_i32_18 : i32
    scf.if %24 {
      %c0_19 = arith.constant 0 : index
      %c0_20 = arith.constant 0 : index
      %25 = vector.load %arg7[%c0_19, %c0_20] : memref<8x1xf32, #tpu.memory_space<vmem>>, vector<8x1xf32>
      %cst_21 = arith.constant 1.562500e-02 : f32
      %26 = vector.broadcast %cst_21 : f32 to vector<8x1xf32>
      %27 = arith.mulf %25, %26 : vector<8x1xf32>
      %c0_22 = arith.constant 0 : index
      %c0_23 = arith.constant 0 : index
      %28 = vector.load %arg8[%c0_22, %c0_23] : memref<8x1xf32, #tpu.memory_space<vmem>>, vector<8x1xf32>
      %cst_24 = arith.constant 1.562500e-02 : f32
      %29 = vector.broadcast %cst_24 : f32 to vector<8x1xf32>
      %30 = arith.mulf %28, %29 : vector<8x1xf32>
      %31 = arith.mulf %27, %27 : vector<8x1xf32>
      %32 = arith.subf %30, %31 : vector<8x1xf32>
      %cst_25 = arith.constant 0.000000e+00 : f32
      %33 = vector.broadcast %cst_25 : f32 to vector<8x1xf32>
      %34 = arith.maximumf %32, %33 : vector<8x1xf32>
      %cst_26 = arith.constant 9.99999974E-6 : f32
      %35 = vector.broadcast %cst_26 : f32 to vector<8x1xf32>
      %36 = arith.addf %34, %35 : vector<8x1xf32>
      %37 = math.rsqrt %36 : vector<8x1xf32>
      %c0_27 = arith.constant 0 : index
      %c0_28 = arith.constant 0 : index
      %c0_29 = arith.constant 0 : index
      %38 = vector.load %arg6[%c0_27, %c0_28, %c0_29] : memref<1x8x128xf32, #tpu.memory_space<vmem>>, vector<1x8x128xf32>
      %39 = vector.shape_cast %38 : vector<1x8x128xf32> to vector<8x128xf32>
      %40 = vector.broadcast %27 : vector<8x1xf32> to vector<8x128xf32>
      %41 = arith.subf %39, %40 : vector<8x128xf32>
      %42 = vector.broadcast %37 : vector<8x1xf32> to vector<8x128xf32>
      %43 = arith.mulf %41, %42 : vector<8x128xf32>
      %cst_30 = arith.constant 0.000000e+00 : f32
      %44 = vector.broadcast %cst_30 : f32 to vector<8x128xf32>
      %45 = arith.maximumf %43, %44 : vector<8x128xf32>
      %c0_31 = arith.constant 0 : index
      %c0_32 = arith.constant 0 : index
      %c0_33 = arith.constant 0 : index
      %46 = vector.load %arg5[%c0_31, %c0_32, %c0_33] : memref<1x8x128xf32, #tpu.memory_space<vmem>>, vector<1x8x128xf32>
      %47 = vector.shape_cast %46 : vector<1x8x128xf32> to vector<8x128xf32>
      %48 = vector.shape_cast %45 : vector<8x128xf32> to vector<1x8x128xf32>
      tpu.vector_store %arg5[%c0_31, %c0_32, %c0_33], %48 {strides = array<i32>} : memref<1x8x128xf32, #tpu.memory_space<vmem>>, vector<1x8x128xf32>,
    } else {
    }
    return
  }
  func.func @transform_0(%arg0: i32, %arg1: i32, %arg2: i32) -> (i32, i32) {
    %c0_i32 = arith.constant 0 : i32
    %c0_i32_0 = arith.constant 0 : i32
    return %arg1, %c0_i32 : i32, i32
  }
  func.func @transform_1(%arg0: i32, %arg1: i32, %arg2: i32) -> (i32, i32, i32) {
    %c0_i32 = arith.constant 0 : i32
    %c0_i32_0 = arith.constant 0 : i32
    return %arg0, %c0_i32, %arg2 : i32, i32, i32
  }
  func.func @transform_2(%arg0: i32, %arg1: i32, %arg2: i32) -> (i32, i32, i32) {
    %c0_i32 = arith.constant 0 : i32
    %c0_i32_0 = arith.constant 0 : i32
    return %arg0, %arg1, %c0_i32 : i32, i32, i32
  }
}

</mosaic_0001>

<llo_original>
// kernel: tpu_custom_call.1
$region0: #{tpu_custom_call.1}
  #allocation0 [shape = 'u32[]', space=smem, size = 0x4, offset = 0x4, fixed_abs, tag = 'smem constant byte address 0x4 - core index']
  #allocation1 [shape = 'u32[144,128]{1,0:T(1,128)}', space=vmem, size = 0x12000, scoped, tag = 'internal scratch']
  #allocation2 [shape = 'f32[1,8,128]{2,1,0:T(8,128)}', space=vmem, size = 0x1000, scoped, tag = 'scratch operand']
  #allocation3 [shape = 'f32[8,1]{1,0:T(8,128)}', space=vmem, size = 0x1000, scoped, tag = 'scratch operand']
  #allocation4 [shape = 'f32[8,1]{1,0:T(8,128)}', space=vmem, size = 0x1000, scoped, tag = 'scratch operand']
  %s0 = inlined_call_operand.hbm [shape: f32[8,128], index: 0, kind: input, shape index: {}]
  %s1 = inlined_call_operand.hbm [shape: f32[2,128,128], index: 1, kind: input, shape index: {}]
  %s2 = inlined_call_operand.hbm [shape: f32[2,8,128], index: 2, kind: output, shape index: {}]
  %s3 = sld [smem:[#allocation0]]
  $region57: #{tpu_custom_call.1} parent=0
    _
  %s5 = ssub.s32 1, %s3
  %s6 = scalar_select 0, %s5, %s3
  $region1: #{tpu_custom_call.1} parent=0
    #allocation5 [shape = 'u8[4096]{0}', space=vmem, size = 0x1000, scoped, tag = 'input window, operand 0, single buffered']
    #allocation6 [shape = 's32[2]{0}', space=sflag, size = 0x8, scoped, tag = 'scoped memory for tpu_custom_call.1']
    #allocation7 [shape = 's32[2]{0}', space=sflag, size = 0x8, scoped, tag = 'scoped memory for tpu_custom_call.1']
    #allocation8 [shape = 'u8[131072]{0}', space=vmem, size = 0x20000, scoped, tag = 'input window, operand 1']
    #allocation9 [shape = 's32[2]{0}', space=sflag, size = 0x8, scoped, tag = 'scoped memory for tpu_custom_call.1']
    #allocation10 [shape = 'u8[8192]{0}', space=vmem, size = 0x2000, scoped, tag = 'output window, operand 0']
    %7 = vsyncpa [#allocation6], 0
    %8 = vsyncpa [#allocation9], 0
    %s9 = scalar_lea.sflag [#allocation9], 1
    %10 = vsyncpa %s9, 0
    %11 = vsyncpa [#allocation7], 0
    %s12 = scalar_lea.sflag [#allocation7], 1
    %13 = vsyncpa %s12, 0
    loop: start=0, step=1, limit=4
    $region2: #{tpu_custom_call.1} parent=1 // loop_pre_header
      _
    $region3: #{tpu_custom_call.1} parent=1 // loop_header
      %s15 = sphi 0, %s19
      %p16 = scmp.ge.s32.totalorder %s15, 4
      %s22 = sphi 0, %s41
      %s23 = sphi 0, %s37
      %s24 = sphi 0, %s33
      %s25 = sphi 0, %s22
      %s26 = sphi 0, %s23
      %s27 = sphi 0, %s24
      %s28 = sphi 0, %s25
      %s29 = sphi 0, %s26
      %s30 = sphi 0, %s27
      %s44 = sphi 0, %s46
      %s47 = sphi 0, %s44
      %s48 = sphi 0, %s47
      %s64 = sphi 0, %s48
      %s72 = sphi 0, %s74
      %s75 = sphi 0, %s72
      %s76 = sphi 0, %s75
      %s92 = sphi 0, %s76
      %s100 = sphi 0, %s102
      %s103 = sphi 0, %s100
      %s104 = sphi 0, %s103
      %s120 = sphi 0, %s104
    $region4: #{tpu_custom_call.1} parent=1 // loop_header_branch
      %18 = sbr.rel (%p16) target = $region8
    $region5: #{tpu_custom_call.1} parent=1 // loop_body
      %s20 = ssub.s32 %s15, 1
      %s21 = ssub.s32 %s15, 2
      %s31 = sadd.s32 1, %s24
      %p32 = scmp.ge.s32.totalorder %s31, 1
      %s33 = scalar_select %p32, 0, %s31
      %s34 = sadd.s32 1, %s23
      %s35 = scalar_select %p32, %s34, %s23
      %p36 = scmp.ge.s32.totalorder %s35, 1
      %s37 = scalar_select %p36, 0, %s35
      %s38 = sadd.s32 1, %s22
      %s39 = scalar_select %p36, %s38, %s22
      %p40 = scmp.ge.s32.totalorder %s39, 2
      %s41 = scalar_select %p40, 0, %s39
      %s42 = ssub.s32 %s23, %s37
      %p43 = scmp.eq.s32.totalorder %s42, 0
      %s45 = sadd.s32 %s44, 1
      %s46 = scalar_select %p43, %s44, %s45
      %p49 = pneg %p43
      %p50 = scmp.eq.s32.totalorder %s15, 1
      %p51 = por %p49, %p50
      %p52 = scmp.ne.s32.totalorder %s44, %s47
      %p53 = scmp.eq.s32.totalorder %s15, 0
      %p54 = por %p52, %p53
      %p55 = scmp.ne.s32.totalorder %s44, %s47
      %p56 = scmp.eq.s32.totalorder %s20, 1
      %p57 = por %p55, %p56
      %p58 = scmp.ne.s32.totalorder %s47, %s48
      %p59 = scmp.eq.s32.totalorder %s20, 0
      %p60 = por %p58, %p59
      %p61 = scmp.ne.s32.totalorder %s47, %s48
      %p62 = scmp.eq.s32.totalorder %s21, 1
      %p63 = por %p61, %p62
      %p65 = scmp.ne.s32.totalorder %s48, %s64
      %p66 = scmp.eq.s32.totalorder %s21, 0
      %p67 = por %p65, %p66
      %s68 = ssub.s32 %s22, %s41
      %s69 = ssub.s32 %s24, %s33
      %s70 = sor.u32 %s68, %s69
      %p71 = scmp.eq.s32.totalorder %s70, 0
      %s73 = sadd.s32 %s72, 1
      %s74 = scalar_select %p71, %s72, %s73
      %p77 = pneg %p71
      %p78 = scmp.eq.s32.totalorder %s15, 1
      %p79 = por %p77, %p78
      %p80 = scmp.ne.s32.totalorder %s72, %s75
      %p81 = scmp.eq.s32.totalorder %s15, 0
      %p82 = por %p80, %p81
      %p83 = scmp.ne.s32.totalorder %s72, %s75
      %p84 = scmp.eq.s32.totalorder %s20, 1
      %p85 = por %p83, %p84
      %p86 = scmp.ne.s32.totalorder %s75, %s76
      %p87 = scmp.eq.s32.totalorder %s20, 0
      %p88 = por %p86, %p87
      %p89 = scmp.ne.s32.totalorder %s75, %s76
      %p90 = scmp.eq.s32.totalorder %s21, 1
      %p91 = por %p89, %p90
      %p93 = scmp.ne.s32.totalorder %s76, %s92
      %p94 = scmp.eq.s32.totalorder %s21, 0
      %p95 = por %p93, %p94
      %s96 = ssub.s32 %s22, %s41
      %s97 = ssub.s32 %s23, %s37
      %s98 = sor.u32 %s96, %s97
      %p99 = scmp.eq.s32.totalorder %s98, 0
      %s101 = sadd.s32 %s100, 1
      %s102 = scalar_select %p99, %s100, %s101
      %p105 = pneg %p99
      %p106 = scmp.eq.s32.totalorder %s15, 1
      %p107 = por %p105, %p106
      %p108 = scmp.ne.s32.totalorder %s100, %s103
      %p109 = scmp.eq.s32.totalorder %s15, 0
      %p110 = por %p108, %p109
      %p111 = scmp.ne.s32.totalorder %s100, %s103
      %p112 = scmp.eq.s32.totalorder %s20, 1
      %p113 = por %p111, %p112
      %p114 = scmp.ne.s32.totalorder %s103, %s104
      %p115 = scmp.eq.s32.totalorder %s20, 0
      %p116 = por %p114, %p115
      %p117 = scmp.ne.s32.totalorder %s103, %s104
      %p118 = scmp.eq.s32.totalorder %s21, 1
      %p119 = por %p117, %p118
      %p121 = scmp.ne.s32.totalorder %s104, %s120
      %p122 = scmp.eq.s32.totalorder %s21, 0
      %p123 = por %p121, %p122
      %p124 = scmp.le.s32.totalorder 1, %s15
      %p125 = scmp.lt.s32.totalorder %s15, 3
      %p126 = pnand %p124, %p125
      %p127 = pneg %p126
      // Predicated region
      $region9: #{tpu_custom_call.1} parent=5 // pred_check
        _
      $region10: #{tpu_custom_call.1} parent=5 // pred_check_branch
        %129 = sbr.rel (%p126) target = $region12
      $region11: #{tpu_custom_call.1} parent=5 // pred_region
        %s130 = ssub.s32 %s15, 1
        // Predicated region
        $region13: #{tpu_custom_call.1} parent=11 // pred_check
          %p131 = pneg %p60
        $region14: #{tpu_custom_call.1} parent=11 // pred_check_branch
          %133 = sbr.rel (%p131) target = $region16
        $region15: #{tpu_custom_call.1} parent=11 // pred_region
          %s135 = ssub.s32 128, 128
          %136 = vsyncadd [#allocation6], %s135
          %s137 = smul.addr %s26, 128
          %s138 = scalar_lea.hbm %s0, %s137
          %s140 = sshll.u32 [#allocation5], 4
          %s141 = int_to_ptr.vmem [resolvable:$true] %s140
          %143 = dma.hbm_to_vmem [thread:$0]  %s138, 128, %s141, [#allocation6]
        $region16: #{tpu_custom_call.1} parent=11 // pred_fallthru
          _
      $region12: #{tpu_custom_call.1} parent=5 // pred_fallthru
        _
      %p144 = scmp.lt.s32.totalorder %s15, 2
      // Predicated region
      $region17: #{tpu_custom_call.1} parent=5 // pred_check
        %p145 = pneg %p144
      $region18: #{tpu_custom_call.1} parent=5 // pred_check_branch
        %147 = sbr.rel (%p145) target = $region20
      $region19: #{tpu_custom_call.1} parent=5 // pred_region
        // Predicated region
        $region21: #{tpu_custom_call.1} parent=19 // pred_check
          %p148 = pneg %p82
        $region22: #{tpu_custom_call.1} parent=19 // pred_check_branch
          %150 = sbr.rel (%p148) target = $region24
        $region23: #{tpu_custom_call.1} parent=19 // pred_region
          %s151 = sand.u32 %s72, 1
          %s152 = scalar_lea.sflag [#allocation9], %s151
          %s153 = sand.u32 %s72, 1
          %s154 = smul.addr %s153, 128
          %s155 = scalar_lea.vmem [#allocation8], %s154
          %s157 = ssub.s32 2048, 2048
          %158 = vsyncadd %s152, %s157
          %s159 = smul.addr %s22, 16
          %s160 = sadd.s32 %s24, %s159
          %s161 = smul.addr %s160, 128
          %s162 = scalar_lea.hbm %s1, %s161
          %s163 = sshll.u32 %s155, 4
          %s164 = int_to_ptr.vmem [resolvable:$true] %s163
          %169 = dma.hbm_to_vmem [thread:$0]  %s162, 2048, %s164, %s152, 128, 128, 8
        $region24: #{tpu_custom_call.1} parent=19 // pred_fallthru
          _
      $region20: #{tpu_custom_call.1} parent=5 // pred_fallthru
        _
      %p170 = scmp.le.s32.totalorder 1, %s15
      %p171 = scmp.lt.s32.totalorder %s15, 3
      %p172 = pnand %p170, %p171
      %p173 = pneg %p172
      // Predicated region
      $region25: #{tpu_custom_call.1} parent=5 // pred_check
        _
      $region26: #{tpu_custom_call.1} parent=5 // pred_check_branch
        %175 = sbr.rel (%p172) target = $region28
      $region27: #{tpu_custom_call.1} parent=5 // pred_region
        %s176 = ssub.s32 %s15, 1
        // Predicated region
        $region29: #{tpu_custom_call.1} parent=27 // pred_check
          %p177 = pneg %p60
        $region30: #{tpu_custom_call.1} parent=27 // pred_check_branch
          %179 = sbr.rel (%p177) target = $region32
        $region31: #{tpu_custom_call.1} parent=27 // pred_region
          %180 = dma.done [#allocation6], 128
        $region32: #{tpu_custom_call.1} parent=27 // pred_fallthru
          _
        %s181 = sand.u32 %s75, 1
        %s182 = scalar_lea.sflag [#allocation9], %s181
        %s183 = sand.u32 %s75, 1
        %s184 = smul.addr %s183, 128
        %s185 = scalar_lea.vmem [#allocation8], %s184
        // Predicated region
        $region33: #{tpu_custom_call.1} parent=27 // pred_check
          %p186 = pneg %p88
        $region34: #{tpu_custom_call.1} parent=27 // pred_check_branch
          %188 = sbr.rel (%p186) target = $region36
        $region35: #{tpu_custom_call.1} parent=27 // pred_region
          %189 = dma.done %s182, 2048
        $region36: #{tpu_custom_call.1} parent=27 // pred_fallthru
          _
        %p190 = pneg %p60
        %p191 = pneg %p57
        %s192 = sand.u32 %s75, 1
        %s193 = scalar_lea.sflag [#allocation9], %s192
        %s194 = sand.u32 %s75, 1
        %s195 = smul.addr %s194, 128
        %s196 = scalar_lea.vmem [#allocation8], %s195
        %p197 = pneg %p88
        %p198 = pneg %p85
        %p199 = pneg %p116
        %p200 = pneg %p113
        %s201 = sand.u32 %s103, 1
        %s202 = scalar_lea.sflag [#allocation7], %s201
        %s203 = sand.u32 %s103, 1
        %s204 = smul.addr %s203, 8
        %s205 = scalar_lea.vmem [#allocation10], %s204
        %p206 = scmp.eq.s32.totalorder %s27, 0
        // Predicated region
        $region37: #{tpu_custom_call.1} parent=27 // pred_check
          %p207 = pneg %p206
        $region38: #{tpu_custom_call.1} parent=27 // pred_check_branch
          %209 = sbr.rel (%p207) target = $region40
        $region39: #{tpu_custom_call.1} parent=27 // pred_region
          %vm210 = vcmask 7168
          %211 = vst.msk [vmem:[#allocation3] sm:$0xff] %vm210, 0.0
          %212 = vst.msk [vmem:[#allocation4] sm:$0xff] %vm210, 0.0
        $region40: #{tpu_custom_call.1} parent=27 // pred_fallthru
          _
        %v213 = vld [vmem:[#allocation5] sm:$0xff]
        %v214 = vld [vmem:[%s185] sm:$0xff]
        %v215 = vld [vmem:[%s185 + $0x8] sm:$0xff]
        %v216 = vld [vmem:[%s185 + $0x10] sm:$0xff]
        %v217 = vld [vmem:[%s185 + $0x18] sm:$0xff]
        %v218 = vld [vmem:[%s185 + $0x20] sm:$0xff]
        %v219 = vld [vmem:[%s185 + $0x28] sm:$0xff]
        %v220 = vld [vmem:[%s185 + $0x30] sm:$0xff]
        %v221 = vld [vmem:[%s185 + $0x38] sm:$0xff]
        %v222 = vld [vmem:[%s185 + $0x40] sm:$0xff]
        %v223 = vld [vmem:[%s185 + $0x48] sm:$0xff]
        %v224 = vld [vmem:[%s185 + $0x50] sm:$0xff]
        %v225 = vld [vmem:[%s185 + $0x58] sm:$0xff]
        %v226 = vld [vmem:[%s185 + $0x60] sm:$0xff]
        %v227 = vld [vmem:[%s185 + $0x68] sm:$0xff]
        %v228 = vld [vmem:[%s185 + $0x70] sm:$0xff]
        %v229 = vld [vmem:[%s185 + $0x78] sm:$0xff]
        %230 = vmatprep.subr.mxu0 0.0
        %231 = vmatpush1.msra.mxu0 %v229
        %232 = vmatprep.subr.mxu0 0.0
        %233 = vmatpush1.msra.mxu0 %v228
        %234 = vmatprep.subr.mxu0 0.0
        %235 = vmatpush1.msra.mxu0 %v227
        %236 = vmatprep.subr.mxu0 0.0
        %237 = vmatpush1.msra.mxu0 %v226
        %238 = vmatprep.subr.mxu0 0.0
        %239 = vmatpush1.msra.mxu0 %v225
        %240 = vmatprep.subr.mxu0 0.0
        %241 = vmatpush1.msra.mxu0 %v224
        %242 = vmatprep.subr.mxu0 0.0
        %243 = vmatpush1.msra.mxu0 %v223
        %244 = vmatprep.subr.mxu0 0.0
        %245 = vmatpush1.msra.mxu0 %v222
        %246 = vmatprep.subr.mxu0 0.0
        %247 = vmatpush1.msra.mxu0 %v221
        %248 = vmatprep.subr.mxu0 0.0
        %249 = vmatpush1.msra.mxu0 %v220
        %250 = vmatprep.subr.mxu0 0.0
        %251 = vmatpush1.msra.mxu0 %v219
        %252 = vmatprep.subr.mxu0 0.0
        %253 = vmatpush1.msra.mxu0 %v218
        %254 = vmatprep.subr.mxu0 0.0
        %255 = vmatpush1.msra.mxu0 %v217
        %256 = vmatprep.subr.mxu0 0.0
        %257 = vmatpush1.msra.mxu0 %v216
        %258 = vmatprep.subr.mxu0 0.0
        %259 = vmatpush1.msra.mxu0 %v215
        %260 = vmatprep.subr.mxu0 0.0
        %261 = vmatpush1.msra.mxu0 %v214
        %262 = vmatprep.subr.mxu0 0.0
        %263 = vmatpush2.msra.mxu0 0.0
        %264 = vmatprep.subr.mxu0 0.0
        %265 = vmatpush2.msra.mxu0 0.0
        %266 = vmatprep.subr.mxu0 0.0
        %267 = vmatpush2.msra.mxu0 0.0
        %268 = vmatprep.subr.mxu0 0.0
        %269 = vmatpush2.msra.mxu0 0.0
        %270 = vmatprep.subr.mxu0 0.0
        %271 = vmatpush2.msra.mxu0 0.0
        %272 = vmatprep.subr.mxu0 0.0
        %273 = vmatpush2.msra.mxu0 0.0
        %274 = vmatprep.subr.mxu0 0.0
        %275 = vmatpush2.msra.mxu0 0.0
        %276 = vmatprep.subr.mxu0 0.0
        %277 = vmatpush2.msra.mxu0 0.0
        %278 = vmatprep.subr.mxu0 0.0
        %279 = vmatpush2.msra.mxu0 0.0
        %280 = vmatprep.subr.mxu0 0.0
        %281 = vmatpush2.msra.mxu0 0.0
        %282 = vmatprep.subr.mxu0 0.0
        %283 = vmatpush2.msra.mxu0 0.0
        %284 = vmatprep.subr.mxu0 0.0
        %285 = vmatpush2.msra.mxu0 0.0
        %286 = vmatprep.subr.mxu0 0.0
        %287 = vmatpush2.msra.mxu0 0.0
        %288 = vmatprep.subr.mxu0 0.0
        %289 = vmatpush2.msra.mxu0 0.0
        %290 = vmatprep.subr.mxu0 0.0
        %291 = vmatpush2.msra.mxu0 0.0
        %292 = vmatprep.subr.mxu0 0.0
        %293 = vmatpush2.msra.mxu0 0.0
        %294 = vmatprep.mubr.f32.mxu0 0.0
        %295 = vmatmul.mubr.f32.gmra.mxu0 %v213
        %v296 = vpop.f32.mrf.mxu0
        %v297 = vadd.f32 0.0, %v296
        %v298 = vpop.f32.mrf.mxu0
        %299 = vdwg.mxu0
        %v300 = vld [vmem:[#allocation3] sm:$0xff]
        %301 = vadd.xlane.f32.xlu0 %v297
        %v302 = vpop.xlane.xlu0 %301
        %v303 = vadd.f32 %v300, %v302
        %vm304 = vcmask 7168
        %305 = vst.msk [vmem:[#allocation3] sm:$0xff] %vm304, %v303
        %v306 = vld [vmem:[#allocation4] sm:$0xff]
        %v307 = vmul.f32 %v297, %v297
        %308 = vadd.xlane.f32.xlu0 %v307
        %v309 = vpop.xlane.xlu0 %308
        %v310 = vadd.f32 %v306, %v309
        %311 = vst.msk [vmem:[#allocation4] sm:$0xff] %vm304, %v310
        %s312 = smul.u32 %s27, 8
        %s313 = scalar_lea.vmem [#allocation2], %s312
        %314 = vst [vmem:[%s313] sm:$0xff] %v297
        // Predicated region
        $region41: #{tpu_custom_call.1} parent=27 // pred_check
          %p315 = pneg %p206
        $region42: #{tpu_custom_call.1} parent=27 // pred_check_branch
          %317 = sbr.rel (%p315) target = $region44
        $region43: #{tpu_custom_call.1} parent=27 // pred_region
          %v318 = vld [vmem:[#allocation3] sm:$0xff]
          %v319 = vmul.f32 %v318, 0.015625
          %v320 = vld [vmem:[#allocation4] sm:$0xff]
          %v321 = vmul.f32 %v320, 0.015625
          %v322 = vmul.f32 %v319, %v319
          %v323 = vsub.f32 %v321, %v322
          %v324 = vmax.f32 %v323, 0.0
          %v325 = vadd.f32 %v324, 1e-05
          %v326 = vrsqrt.pop %v325
          %v327 = vld [vmem:[#allocation2] sm:$0xff]
          %329 = vset.pattern.permute.xlu0 0
          %330 = vperm.xlu0 %329, %v319
          %v331 = vpop.permute.xlu0 %330
          %v333 = vsub.f32 %v327, %v331
          %335 = vset.pattern.permute.xlu0 0
          %336 = vperm.xlu0 %335, %v326
          %v337 = vpop.permute.xlu0 %336
          %v339 = vmul.f32 %v333, %v337
          %v340 = vmax.f32 %v339, 0.0
          %341 = vst [vmem:[%s205] sm:$0xff] %v340
        $region44: #{tpu_custom_call.1} parent=27 // pred_fallthru
          _
        %s342 = sand.u32 %s103, 1
        %s343 = scalar_lea.sflag [#allocation7], %s342
        %s344 = sand.u32 %s103, 1
        %s345 = smul.addr %s344, 8
        %s346 = scalar_lea.vmem [#allocation10], %s345
        // Predicated region
        $region45: #{tpu_custom_call.1} parent=27 // pred_check
          %p347 = pneg %p113
        $region46: #{tpu_custom_call.1} parent=27 // pred_check_branch
          %349 = sbr.rel (%p347) target = $region48
        $region47: #{tpu_custom_call.1} parent=27 // pred_region
          %s351 = ssub.s32 128, 128
          %352 = vsyncadd %s343, %s351
          %s353 = sadd.s32 %s26, %s25
          %s354 = smul.addr %s353, 128
          %s355 = scalar_lea.hbm %s2, %s354
          %s357 = sshll.u32 %s346, 4
          %s358 = int_to_ptr.vmem [resolvable:$true] %s357
          %360 = dma.vmem_to_hbm [thread:$0]  %s358, 128, %s355, %s343
        $region48: #{tpu_custom_call.1} parent=27 // pred_fallthru
          _
      $region28: #{tpu_custom_call.1} parent=5 // pred_fallthru
        _
      %p361 = scmp.le.s32.totalorder 2, %s15
      // Predicated region
      $region49: #{tpu_custom_call.1} parent=5 // pred_check
        %p362 = pneg %p361
      $region50: #{tpu_custom_call.1} parent=5 // pred_check_branch
        %364 = sbr.rel (%p362) target = $region52
      $region51: #{tpu_custom_call.1} parent=5 // pred_region
        %s365 = ssub.s32 %s15, 2
        // Predicated region
        $region53: #{tpu_custom_call.1} parent=51 // pred_check
          %p366 = pneg %p119
        $region54: #{tpu_custom_call.1} parent=51 // pred_check_branch
          %368 = sbr.rel (%p366) target = $region56
        $region55: #{tpu_custom_call.1} parent=51 // pred_region
          %s369 = sand.u32 %s104, 1
          %s370 = scalar_lea.sflag [#allocation7], %s369
          %s371 = sand.u32 %s104, 1
          %s372 = smul.addr %s371, 8
          %s373 = scalar_lea.vmem [#allocation10], %s372
          %374 = dma.done %s370, 128
        $region56: #{tpu_custom_call.1} parent=51 // pred_fallthru
          _
      $region52: #{tpu_custom_call.1} parent=5 // pred_fallthru
        _
    $region6: #{tpu_custom_call.1} parent=1 // loop_footer
      %s19 = sadd.s32 1, %s15
    $region7: #{tpu_custom_call.1} parent=1 // loop_footer_branch
      %14 = sbr.rel target = $region3
    $region8: #{tpu_custom_call.1} parent=1 // loop_exit
      _
    %375 = vsyncpa [#allocation6], 1
    %s376 = scalar_lea.sflag [#allocation6], 1
    %377 = vsyncpa %s376, 1
    %378 = vsyncpa [#allocation9], 1
    %s379 = scalar_lea.sflag [#allocation9], 1
    %380 = vsyncpa %s379, 1
    %381 = vsyncpa [#allocation7], 1
    %s382 = scalar_lea.sflag [#allocation7], 1
    %383 = vsyncpa %s382, 1

</llo_original>
